<compile_context>
chip_gen: v7x
topology: tpu7x:2x2x1
jax: 0.10.0
libtpu: 0.0.40
codegen_flags: <defaults>
</compile_context>

<pallas_src>
import functools

import jax
import jax.numpy as jnp
from jax import lax
from jax.experimental import pallas as pl
from jax.experimental.pallas import tpu as pltpu


def fused_rnn_kernel(ids_ref, h0_ref, emb_ref, wi_ref, wh_ref, bi_ref, bhn_ref,
                     wd_ref, bd_ref, logits_ref, hfinal_ref, h_scratch,
                     *, n_layers, hidden_size):
    """One grid step == one character of the autoregressive multi-layer GRU.

    ids_ref   : SMEM (T,) int32      token ids (scalar prefetch)
    h0_ref    : (L, 1, H)            initial hidden state
    emb_ref   : (V, H)               embedding table (VMEM resident)
    wi_ref    : (L, H, 3H)           input->gates weights, columns [r|z|n]
    wh_ref    : (L, H, 3H)           hidden->gates weights, columns [r|z|n]
    bi_ref    : (L, 1, 3H)           folded biases [b_ir+b_hr | b_iz+b_hz | b_in]
    bhn_ref   : (L, 1, H)            b_hn (kept separate: it is scaled by r)
    wd_ref    : (H, Opad)            decoder weight, transposed + lane padded
    bd_ref    : (1, Opad)            decoder bias, lane padded
    logits_ref: (1, Opad)            this step's logits (leading T dim squeezed)
    hfinal_ref: (L, 1, H)            final hidden state (VMEM-resident output)
    h_scratch : VMEM (L, 1, H) f32   recurrent state carried across grid steps

    Gate math matches torch.nn.GRU: r,z,n order; n uses r*(W_hn h + b_hn).
    """
    H = hidden_size
    t = pl.program_id(0)

    @pl.when(t == 0)
    def _init():
        h_scratch[...] = h0_ref[...].astype(jnp.float32)

    # In-kernel embedding lookup from the VMEM-resident table.
    tok = ids_ref[t]
    x = emb_ref[pl.ds(tok, 1), :].astype(jnp.float32)              # (1, H)

    for l in range(n_layers):                                      # static unroll
        h = h_scratch[l]                                           # (1, H) f32
        # One fused MXU contraction per operand instead of 3 per gate.
        gi = jnp.dot(x, wi_ref[l], preferred_element_type=jnp.float32) + bi_ref[l]
        gh = jnp.dot(h, wh_ref[l], preferred_element_type=jnp.float32)
        r = jax.nn.sigmoid(gi[:, 0:H] + gh[:, 0:H])
        z = jax.nn.sigmoid(gi[:, H:2 * H] + gh[:, H:2 * H])
        n = jnp.tanh(gi[:, 2 * H:3 * H] + r * (gh[:, 2 * H:3 * H] + bhn_ref[l]))
        h_new = (1.0 - z) * n + z * h                              # (1, H)
        h_scratch[l] = h_new
        x = h_new                                                  # feed next layer

    out = jnp.dot(x, wd_ref[...], preferred_element_type=jnp.float32) + bd_ref[...]
    logits_ref[...] = out.astype(logits_ref.dtype)                 # lane-dense store

    @pl.when(t == pl.num_programs(0) - 1)
    def _finalize():
        hfinal_ref[...] = h_scratch[...].astype(hfinal_ref.dtype)  # single writeback


def pack_params(raw):
    """Convert PyTorch-layout parameters into the fused kernel layout."""
    H = raw["emb"].shape[1]
    O = raw["w_dec"].shape[0]
    o_pad = ((O + 127) // 128) * 128

    wi = jnp.transpose(raw["w_ih"], (0, 2, 1))                     # (L, H, 3H)
    wh = jnp.transpose(raw["w_hh"], (0, 2, 1))                     # (L, H, 3H)
    b_ih, b_hh = raw["b_ih"], raw["b_hh"]
    bi_fold = jnp.concatenate(
        [b_ih[:, 0:H] + b_hh[:, 0:H],
         b_ih[:, H:2 * H] + b_hh[:, H:2 * H],
         b_ih[:, 2 * H:3 * H]], axis=-1)[:, None, :]               # (L, 1, 3H)
    bhn = b_hh[:, 2 * H:3 * H][:, None, :]                         # (L, 1, H)

    wd = jnp.zeros((H, o_pad), jnp.float32).at[:, :O].set(raw["w_dec"].T)
    bd = jnp.zeros((1, o_pad), jnp.float32).at[:, :O].set(raw["b_dec"][None, :])

    return {"emb": raw["emb"], "wi": wi, "wh": wh, "bi": bi_fold,
            "bhn": bhn, "wd": wd, "bd": bd, "out_dim": O}


def rnn_forward_sequence(ids, hidden, p):
    """Run the whole id sequence through the fused kernel.

    Semantically identical to calling the torch module step-by-step:
    for t: (logits[t], hidden) = RNN.forward(ids[t], hidden).
    Returns (logits (T, O), final hidden (L, 1, H)).
    """
    T = int(ids.shape[0])
    L, _, H = hidden.shape
    o_pad = p["wd"].shape[1]
    O = p["out_dim"]

    kernel = functools.partial(fused_rnn_kernel, n_layers=L, hidden_size=H)

    def const(ndim):
        return lambda t, ids_ref: (0,) * ndim

    grid_spec = pltpu.PrefetchScalarGridSpec(
        num_scalar_prefetch=1,
        grid=(T,),
        in_specs=[
            pl.BlockSpec(hidden.shape, const(3)),        # h0       (L,1,H)
            pl.BlockSpec(p["emb"].shape, const(2)),      # emb      (V,H)
            pl.BlockSpec(p["wi"].shape, const(3)),       # wi       (L,H,3H)
            pl.BlockSpec(p["wh"].shape, const(3)),       # wh       (L,H,3H)
            pl.BlockSpec(p["bi"].shape, const(3)),       # bi       (L,1,3H)
            pl.BlockSpec(p["bhn"].shape, const(3)),      # bhn      (L,1,H)
            pl.BlockSpec(p["wd"].shape, const(2)),       # wd       (H,Opad)
            pl.BlockSpec(p["bd"].shape, const(2)),       # bd       (1,Opad)
        ],
        out_specs=(
            pl.BlockSpec((None, 1, o_pad), lambda t, ids_ref: (t, 0, 0)),  # logits
            pl.BlockSpec((L, 1, H), const(3)),                              # final hidden
        ),
        scratch_shapes=[pltpu.VMEM((L, 1, H), jnp.float32)],
    )

    logits_pad, h_final = pl.pallas_call(
        kernel,
        grid_spec=grid_spec,
        out_shape=(jax.ShapeDtypeStruct((T, 1, o_pad), jnp.float32),
                   jax.ShapeDtypeStruct((L, 1, H), jnp.float32)),
        compiler_params=pltpu.CompilerParams(
            dimension_semantics=("arbitrary",)),         # recurrence: sequential grid
    )(ids.astype(jnp.int32), hidden, p["emb"], p["wi"], p["wh"],
      p["bi"], p["bhn"], p["wd"], p["bd"])

    return logits_pad[:, 0, :O], h_final


def rnn_forward(idx, hidden, p):
    """Single-step API matching RNN.forward(input, hidden) of the torch module."""
    ids = jnp.reshape(idx, (1,)).astype(jnp.int32)
    logits, h_new = rnn_forward_sequence(ids, hidden, p)
    return logits, h_new                                  # (1, O), (L, 1, H)


def rnn_sequence_ref(ids, hidden, raw):
    """Pure-JAX reference mirroring torch.nn.Embedding + GRU + Linear semantics."""
    H = raw["emb"].shape[1]
    L = hidden.shape[0]
    hi = lax.Precision.HIGHEST
    h = hidden
    logits = []
    for t in range(ids.shape[0]):
        x = raw["emb"][ids[t]][None, :]
        new_h = []
        for l in range(L):
            hl = h[l]
            gi = jnp.dot(x, raw["w_ih"][l].T, precision=hi) + raw["b_ih"][l]
            gh = jnp.dot(hl, raw["w_hh"][l].T, precision=hi) + raw["b_hh"][l]
            r = jax.nn.sigmoid(gi[:, 0:H] + gh[:, 0:H])
            z = jax.nn.sigmoid(gi[:, H:2 * H] + gh[:, H:2 * H])
            n = jnp.tanh(gi[:, 2 * H:3 * H] + r * gh[:, 2 * H:3 * H])
            h_new = (1.0 - z) * n + z * hl
            new_h.append(h_new)
            x = h_new
        h = jnp.stack(new_h, axis=0)
        logits.append(jnp.dot(x, raw["w_dec"].T, precision=hi) + raw["b_dec"][None, :])
    return jnp.concatenate(logits, axis=0), h


if __name__ == "__main__":
    input_size = 16      # vocab size
    hidden_size = 32
    output_size = 16
    n_layers = 2
    seq_len = 8

    key = jax.random.PRNGKey(0)
    ks = jax.random.split(key, 8)
    s = 0.1
    raw = {
        "emb":   s * jax.random.normal(ks[0], (input_size, hidden_size), jnp.float32),
        "w_ih":  s * jax.random.normal(ks[1], (n_layers, 3 * hidden_size, hidden_size), jnp.float32),
        "w_hh":  s * jax.random.normal(ks[2], (n_layers, 3 * hidden_size, hidden_size), jnp.float32),
        "b_ih":  s * jax.random.normal(ks[3], (n_layers, 3 * hidden_size), jnp.float32),
        "b_hh":  s * jax.random.normal(ks[4], (n_layers, 3 * hidden_size), jnp.float32),
        "w_dec": s * jax.random.normal(ks[5], (output_size, hidden_size), jnp.float32),
        "b_dec": s * jax.random.normal(ks[6], (output_size,), jnp.float32),
    }
    packed = pack_params(raw)

    ids = jax.random.randint(ks[7], (seq_len,), 0, input_size, dtype=jnp.int32)
    hidden0 = jnp.zeros((n_layers, 1, hidden_size), jnp.float32)   # init_hidden()

    # Fused full-sequence call.
    logits, h_final = rnn_forward_sequence(ids, hidden0, packed)
    jax.block_until_ready((logits, h_final))

    logits_ref, h_ref = rnn_sequence_ref(ids, hidden0, raw)
    assert logits.shape == (seq_len, output_size)
    assert h_final.shape == (n_layers, 1, hidden_size)
    assert jnp.allclose(logits, logits_ref, atol=1e-4, rtol=1e-4), \
        float(jnp.max(jnp.abs(logits - logits_ref)))
    assert jnp.allclose(h_final, h_ref, atol=1e-4, rtol=1e-4), \
        float(jnp.max(jnp.abs(h_final - h_ref)))

    # Single-step API parity with the torch module's forward(input, hidden).
    out1, h1 = rnn_forward(ids[0], hidden0, packed)
    jax.block_until_ready((out1, h1))
    assert out1.shape == (1, output_size)
    assert jnp.allclose(out1, logits_ref[0:1], atol=1e-4, rtol=1e-4)

    print("KERNEL_OK")
</pallas_src>

<mosaic_0001>
module attributes {stable_mosaic.version = 11 : i64} {
  func.func @fused_rnn_kernel(%arg0: i32, %arg1: memref<8xi32, #tpu.memory_space<smem>>, %arg2: memref<2x1x32xf32, #tpu.memory_space<vmem>>, %arg3: memref<16x32xf32, #tpu.memory_space<vmem>>, %arg4: memref<2x32x96xf32, #tpu.memory_space<vmem>>, %arg5: memref<2x32x96xf32, #tpu.memory_space<vmem>>, %arg6: memref<2x1x96xf32, #tpu.memory_space<vmem>>, %arg7: memref<2x1x32xf32, #tpu.memory_space<vmem>>, %arg8: memref<32x128xf32, #tpu.memory_space<vmem>>, %arg9: memref<1x128xf32, #tpu.memory_space<vmem>>, %arg10: memref<1x1x128xf32, #tpu.memory_space<vmem>>, %arg11: memref<2x1x32xf32, #tpu.memory_space<vmem>>, %arg12: memref<2x1x32xf32, #tpu.memory_space<vmem>>) attributes {dimension_semantics = [#tpu.dimension_semantics<arbitrary>], iteration_bounds = array<i64: 8>, scalar_prefetch = 1 : i64, scratch_operands = 1 : i64, tpu.core_type = #tpu.core_type<tc>, window_params = [{pipeline_mode = #tpu.pipeline_mode<synchronous>, transform_indices = @transform_0, window_bounds = array<i64: 2, 1, 32>}, {pipeline_mode = #tpu.pipeline_mode<synchronous>, transform_indices = @transform_1, window_bounds = array<i64: 16, 32>}, {pipeline_mode = #tpu.pipeline_mode<synchronous>, transform_indices = @transform_2, window_bounds = array<i64: 2, 32, 96>}, {pipeline_mode = #tpu.pipeline_mode<synchronous>, transform_indices = @transform_3, window_bounds = array<i64: 2, 32, 96>}, {pipeline_mode = #tpu.pipeline_mode<synchronous>, transform_indices = @transform_4, window_bounds = array<i64: 2, 1, 96>}, {pipeline_mode = #tpu.pipeline_mode<synchronous>, transform_indices = @transform_5, window_bounds = array<i64: 2, 1, 32>}, {pipeline_mode = #tpu.pipeline_mode<synchronous>, transform_indices = @transform_6, window_bounds = array<i64: 32, 128>}, {pipeline_mode = #tpu.pipeline_mode<synchronous>, transform_indices = @transform_7, window_bounds = array<i64: 1, 128>}, {transform_indices = @transform_8, window_bounds = array<i64: 1, 1, 128>}, {pipeline_mode = #tpu.pipeline_mode<synchronous>, transform_indices = @transform_9, window_bounds = array<i64: 2, 1, 32>}]} {
    %c0_i32 = arith.constant 0 : i32
    %0 = arith.cmpi eq, %arg0, %c0_i32 : i32
    %1 = arith.extui %0 : i1 to i32
    %c0_i32_0 = arith.constant 0 : i32
    %2 = arith.cmpi ne, %1, %c0_i32_0 : i32
    scf.if %2 {
      %c0_54 = arith.constant 0 : index
      %c0_55 = arith.constant 0 : index
      %c0_56 = arith.constant 0 : index
      %103 = vector.load %arg2[%c0_54, %c0_55, %c0_56] : memref<2x1x32xf32, #tpu.memory_space<vmem>>, vector<2x1x32xf32>
      %c0_57 = arith.constant 0 : index
      %c0_58 = arith.constant 0 : index
      %c0_59 = arith.constant 0 : index
      %104 = vector.load %arg12[%c0_57, %c0_58, %c0_59] : memref<2x1x32xf32, #tpu.memory_space<vmem>>, vector<2x1x32xf32>
      tpu.vector_store %arg12[%c0_57, %c0_58, %c0_59], %103 {strides = array<i32>} : memref<2x1x32xf32, #tpu.memory_space<vmem>>, vector<2x1x32xf32>,
    } else {
    }
    %3 = arith.index_cast %arg0 : i32 to index
    %4 = memref.load %arg1[%3] : memref<8xi32, #tpu.memory_space<smem>>
    %5 = arith.index_cast %4 : i32 to index
    %c0 = arith.constant 0 : index
    %6 = vector.load %arg3[%5, %c0] : memref<16x32xf32, #tpu.memory_space<vmem>>, vector<1x32xf32>
    %c0_1 = arith.constant 0 : index
    %c0_2 = arith.constant 0 : index
    %c0_3 = arith.constant 0 : index
    %7 = vector.load %arg12[%c0_1, %c0_2, %c0_3] : memref<2x1x32xf32, #tpu.memory_space<vmem>>, vector<1x1x32xf32>
    %8 = vector.shape_cast %7 : vector<1x1x32xf32> to vector<1x32xf32>
    %c0_4 = arith.constant 0 : index
    %c0_5 = arith.constant 0 : index
    %c0_6 = arith.constant 0 : index
    %9 = vector.load %arg4[%c0_4, %c0_5, %c0_6] : memref<2x32x96xf32, #tpu.memory_space<vmem>>, vector<1x32x96xf32>
    %10 = vector.shape_cast %9 : vector<1x32x96xf32> to vector<32x96xf32>
    %cst = arith.constant dense<0.000000e+00> : vector<1x96xf32>
    %11 = tpu.matmul %6, %10, %cst {dimension_numbers = #tpu.dot_dimension_numbers<[1], [0], [0], [1], [0, 0, 1, 1], [], []>} : vector<1x32xf32>, vector<32x96xf32>, vector<1x96xf32> -> vector<1x96xf32>
    %c0_7 = arith.constant 0 : index
    %c0_8 = arith.constant 0 : index
    %c0_9 = arith.constant 0 : index
    %12 = vector.load %arg6[%c0_7, %c0_8, %c0_9] : memref<2x1x96xf32, #tpu.memory_space<vmem>>, vector<1x1x96xf32>
    %13 = vector.shape_cast %12 : vector<1x1x96xf32> to vector<1x96xf32>
    %14 = arith.addf %11, %13 : vector<1x96xf32>
    %c0_10 = arith.constant 0 : index
    %c0_11 = arith.constant 0 : index
    %c0_12 = arith.constant 0 : index
    %15 = vector.load %arg5[%c0_10, %c0_11, %c0_12] : memref<2x32x96xf32, #tpu.memory_space<vmem>>, vector<1x32x96xf32>
    %16 = vector.shape_cast %15 : vector<1x32x96xf32> to vector<32x96xf32>
    %cst_13 = arith.constant dense<0.000000e+00> : vector<1x96xf32>
    %17 = tpu.matmul %8, %16, %cst_13 {dimension_numbers = #tpu.dot_dimension_numbers<[1], [0], [0], [1], [0, 0, 1, 1], [], []>} : vector<1x32xf32>, vector<32x96xf32>, vector<1x96xf32> -> vector<1x96xf32>
    %18 = vector.extract_strided_slice %14 {offsets = [0, 0], sizes = [1, 32], strides = [1, 1]} : vector<1x96xf32> to vector<1x32xf32>
    %19 = vector.extract_strided_slice %17 {offsets = [0, 0], sizes = [1, 32], strides = [1, 1]} : vector<1x96xf32> to vector<1x32xf32>
    %20 = arith.addf %18, %19 : vector<1x32xf32>
    %21 = arith.negf %20 : vector<1x32xf32>
    %22 = math.exp %21 : vector<1x32xf32>
    %cst_14 = arith.constant 1.000000e+00 : f32
    %23 = vector.broadcast %cst_14 : f32 to vector<1x32xf32>
    %24 = arith.addf %23, %22 : vector<1x32xf32>
    %25 = arith.divf %23, %24 : vector<1x32xf32>
    %26 = vector.extract_strided_slice %14 {offsets = [0, 32], sizes = [1, 32], strides = [1, 1]} : vector<1x96xf32> to vector<1x32xf32>
    %27 = vector.extract_strided_slice %17 {offsets = [0, 32], sizes = [1, 32], strides = [1, 1]} : vector<1x96xf32> to vector<1x32xf32>
    %28 = arith.addf %26, %27 : vector<1x32xf32>
    %29 = arith.negf %28 : vector<1x32xf32>
    %30 = math.exp %29 : vector<1x32xf32>
    %cst_15 = arith.constant 1.000000e+00 : f32
    %31 = vector.broadcast %cst_15 : f32 to vector<1x32xf32>
    %32 = arith.addf %31, %30 : vector<1x32xf32>
    %33 = arith.divf %31, %32 : vector<1x32xf32>
    %34 = vector.extract_strided_slice %14 {offsets = [0, 64], sizes = [1, 32], strides = [1, 1]} : vector<1x96xf32> to vector<1x32xf32>
    %35 = vector.extract_strided_slice %17 {offsets = [0, 64], sizes = [1, 32], strides = [1, 1]} : vector<1x96xf32> to vector<1x32xf32>
    %c0_16 = arith.constant 0 : index
    %c0_17 = arith.constant 0 : index
    %c0_18 = arith.constant 0 : index
    %36 = vector.load %arg7[%c0_16, %c0_17, %c0_18] : memref<2x1x32xf32, #tpu.memory_space<vmem>>, vector<1x1x32xf32>
    %37 = vector.shape_cast %36 : vector<1x1x32xf32> to vector<1x32xf32>
    %38 = arith.addf %35, %37 : vector<1x32xf32>
    %39 = arith.mulf %25, %38 : vector<1x32xf32>
    %40 = arith.addf %34, %39 : vector<1x32xf32>
    %41 = math.tanh %40 : vector<1x32xf32>
    %cst_19 = arith.constant 1.000000e+00 : f32
    %42 = vector.broadcast %cst_19 : f32 to vector<1x32xf32>
    %43 = arith.subf %42, %33 : vector<1x32xf32>
    %44 = arith.mulf %43, %41 : vector<1x32xf32>
    %45 = arith.mulf %33, %8 : vector<1x32xf32>
    %46 = arith.addf %44, %45 : vector<1x32xf32>
    %c0_20 = arith.constant 0 : index
    %c0_21 = arith.constant 0 : index
    %c0_22 = arith.constant 0 : index
    %47 = vector.load %arg12[%c0_20, %c0_21, %c0_22] : memref<2x1x32xf32, #tpu.memory_space<vmem>>, vector<1x1x32xf32>
    %48 = vector.shape_cast %47 : vector<1x1x32xf32> to vector<1x32xf32>
    %49 = vector.shape_cast %46 : vector<1x32xf32> to vector<1x1x32xf32>
    tpu.vector_store %arg12[%c0_20, %c0_21, %c0_22], %49 {strides = array<i32>} : memref<2x1x32xf32, #tpu.memory_space<vmem>>, vector<1x1x32xf32>,
    %c1 = arith.constant 1 : index
    %c0_23 = arith.constant 0 : index
    %c0_24 = arith.constant 0 : index
    %50 = vector.load %arg12[%c1, %c0_23, %c0_24] : memref<2x1x32xf32, #tpu.memory_space<vmem>>, vector<1x1x32xf32>
    %51 = vector.shape_cast %50 : vector<1x1x32xf32> to vector<1x32xf32>
    %c1_25 = arith.constant 1 : index
    %c0_26 = arith.constant 0 : index
    %c0_27 = arith.constant 0 : index
    %52 = vector.load %arg4[%c1_25, %c0_26, %c0_27] : memref<2x32x96xf32, #tpu.memory_space<vmem>>, vector<1x32x96xf32>
    %53 = vector.shape_cast %52 : vector<1x32x96xf32> to vector<32x96xf32>
    %cst_28 = arith.constant dense<0.000000e+00> : vector<1x96xf32>
    %54 = tpu.matmul %46, %53, %cst_28 {dimension_numbers = #tpu.dot_dimension_numbers<[1], [0], [0], [1], [0, 0, 1, 1], [], []>} : vector<1x32xf32>, vector<32x96xf32>, vector<1x96xf32> -> vector<1x96xf32>
    %c1_29 = arith.constant 1 : index
    %c0_30 = arith.constant 0 : index
    %c0_31 = arith.constant 0 : index
    %55 = vector.load %arg6[%c1_29, %c0_30, %c0_31] : memref<2x1x96xf32, #tpu.memory_space<vmem>>, vector<1x1x96xf32>
    %56 = vector.shape_cast %55 : vector<1x1x96xf32> to vector<1x96xf32>
    %57 = arith.addf %54, %56 : vector<1x96xf32>
    %c1_32 = arith.constant 1 : index
    %c0_33 = arith.constant 0 : index
    %c0_34 = arith.constant 0 : index
    %58 = vector.load %arg5[%c1_32, %c0_33, %c0_34] : memref<2x32x96xf32, #tpu.memory_space<vmem>>, vector<1x32x96xf32>
    %59 = vector.shape_cast %58 : vector<1x32x96xf32> to vector<32x96xf32>
    %cst_35 = arith.constant dense<0.000000e+00> : vector<1x96xf32>
    %60 = tpu.matmul %51, %59, %cst_35 {dimension_numbers = #tpu.dot_dimension_numbers<[1], [0], [0], [1], [0, 0, 1, 1], [], []>} : vector<1x32xf32>, vector<32x96xf32>, vector<1x96xf32> -> vector<1x96xf32>
    %61 = vector.extract_strided_slice %57 {offsets = [0, 0], sizes = [1, 32], strides = [1, 1]} : vector<1x96xf32> to vector<1x32xf32>
    %62 = vector.extract_strided_slice %60 {offsets = [0, 0], sizes = [1, 32], strides = [1, 1]} : vector<1x96xf32> to vector<1x32xf32>
    %63 = arith.addf %61, %62 : vector<1x32xf32>
    %64 = arith.negf %63 : vector<1x32xf32>
    %65 = math.exp %64 : vector<1x32xf32>
    %cst_36 = arith.constant 1.000000e+00 : f32
    %66 = vector.broadcast %cst_36 : f32 to vector<1x32xf32>
    %67 = arith.addf %66, %65 : vector<1x32xf32>
    %68 = arith.divf %66, %67 : vector<1x32xf32>
    %69 = vector.extract_strided_slice %57 {offsets = [0, 32], sizes = [1, 32], strides = [1, 1]} : vector<1x96xf32> to vector<1x32xf32>
    %70 = vector.extract_strided_slice %60 {offsets = [0, 32], sizes = [1, 32], strides = [1, 1]} : vector<1x96xf32> to vector<1x32xf32>
    %71 = arith.addf %69, %70 : vector<1x32xf32>
    %72 = arith.negf %71 : vector<1x32xf32>
    %73 = math.exp %72 : vector<1x32xf32>
    %cst_37 = arith.constant 1.000000e+00 : f32
    %74 = vector.broadcast %cst_37 : f32 to vector<1x32xf32>
    %75 = arith.addf %74, %73 : vector<1x32xf32>
    %76 = arith.divf %74, %75 : vector<1x32xf32>
    %77 = vector.extract_strided_slice %57 {offsets = [0, 64], sizes = [1, 32], strides = [1, 1]} : vector<1x96xf32> to vector<1x32xf32>
    %78 = vector.extract_strided_slice %60 {offsets = [0, 64], sizes = [1, 32], strides = [1, 1]} : vector<1x96xf32> to vector<1x32xf32>
    %c1_38 = arith.constant 1 : index
    %c0_39 = arith.constant 0 : index
    %c0_40 = arith.constant 0 : index
    %79 = vector.load %arg7[%c1_38, %c0_39, %c0_40] : memref<2x1x32xf32, #tpu.memory_space<vmem>>, vector<1x1x32xf32>
    %80 = vector.shape_cast %79 : vector<1x1x32xf32> to vector<1x32xf32>
    %81 = arith.addf %78, %80 : vector<1x32xf32>
    %82 = arith.mulf %68, %81 : vector<1x32xf32>
    %83 = arith.addf %77, %82 : vector<1x32xf32>
    %84 = math.tanh %83 : vector<1x32xf32>
    %cst_41 = arith.constant 1.000000e+00 : f32
    %85 = vector.broadcast %cst_41 : f32 to vector<1x32xf32>
    %86 = arith.subf %85, %76 : vector<1x32xf32>
    %87 = arith.mulf %86, %84 : vector<1x32xf32>
    %88 = arith.mulf %76, %51 : vector<1x32xf32>
    %89 = arith.addf %87, %88 : vector<1x32xf32>
    %c1_42 = arith.constant 1 : index
    %c0_43 = arith.constant 0 : index
    %c0_44 = arith.constant 0 : index
    %90 = vector.load %arg12[%c1_42, %c0_43, %c0_44] : memref<2x1x32xf32, #tpu.memory_space<vmem>>, vector<1x1x32xf32>
    %91 = vector.shape_cast %90 : vector<1x1x32xf32> to vector<1x32xf32>
    %92 = vector.shape_cast %89 : vector<1x32xf32> to vector<1x1x32xf32>
    tpu.vector_store %arg12[%c1_42, %c0_43, %c0_44], %92 {strides = array<i32>} : memref<2x1x32xf32, #tpu.memory_space<vmem>>, vector<1x1x32xf32>,
    %c0_45 = arith.constant 0 : index
    %c0_46 = arith.constant 0 : index
    %93 = vector.load %arg8[%c0_45, %c0_46] : memref<32x128xf32, #tpu.memory_space<vmem>>, vector<32x128xf32>
    %cst_47 = arith.constant dense<0.000000e+00> : vector<1x128xf32>
    %94 = tpu.matmul %89, %93, %cst_47 {dimension_numbers = #tpu.dot_dimension_numbers<[1], [0], [0], [1], [0, 0, 1, 1], [], []>} : vector<1x32xf32>, vector<32x128xf32>, vector<1x128xf32> -> vector<1x128xf32>
    %c0_48 = arith.constant 0 : index
    %c0_49 = arith.constant 0 : index
    %95 = vector.load %arg9[%c0_48, %c0_49] : memref<1x128xf32, #tpu.memory_space<vmem>>, vector<1x128xf32>
    %96 = arith.addf %94, %95 : vector<1x128xf32>
    %c0_50 = arith.constant 0 : index
    %c0_51 = arith.constant 0 : index
    %c0_52 = arith.constant 0 : index
    %97 = vector.load %arg10[%c0_50, %c0_51, %c0_52] : memref<1x1x128xf32, #tpu.memory_space<vmem>>, vector<1x1x128xf32>
    %98 = vector.shape_cast %97 : vector<1x1x128xf32> to vector<1x128xf32>
    %99 = vector.shape_cast %96 : vector<1x128xf32> to vector<1x1x128xf32>
    tpu.vector_store %arg10[%c0_50, %c0_51, %c0_52], %99 {strides = array<i32>} : memref<1x1x128xf32, #tpu.memory_space<vmem>>, vector<1x1x128xf32>,
    %c7_i32 = arith.constant 7 : i32
    %100 = arith.cmpi eq, %arg0, %c7_i32 : i32
    %101 = arith.extui %100 : i1 to i32
    %c0_i32_53 = arith.constant 0 : i32
    %102 = arith.cmpi ne, %101, %c0_i32_53 : i32
    scf.if %102 {
      %c0_54 = arith.constant 0 : index
      %c0_55 = arith.constant 0 : index
      %c0_56 = arith.constant 0 : index
      %103 = vector.load %arg12[%c0_54, %c0_55, %c0_56] : memref<2x1x32xf32, #tpu.memory_space<vmem>>, vector<2x1x32xf32>
      %c0_57 = arith.constant 0 : index
      %c0_58 = arith.constant 0 : index
      %c0_59 = arith.constant 0 : index
      %104 = vector.load %arg11[%c0_57, %c0_58, %c0_59] : memref<2x1x32xf32, #tpu.memory_space<vmem>>, vector<2x1x32xf32>
      tpu.vector_store %arg11[%c0_57, %c0_58, %c0_59], %103 {strides = array<i32>} : memref<2x1x32xf32, #tpu.memory_space<vmem>>, vector<2x1x32xf32>,
    } else {
    }
    return
  }
  func.func @transform_0(%arg0: i32, %arg1: memref<8xi32, #tpu.memory_space<smem>>) -> (i32, i32, i32) {
    %c0_i32 = arith.constant 0 : i32
    %c0_i32_0 = arith.constant 0 : i32
    %c0_i32_1 = arith.constant 0 : i32
    %c0_i32_2 = arith.constant 0 : i32
    return %c0_i32, %c0_i32_0, %c0_i32_1 : i32, i32, i32
  }
  func.func @transform_1(%arg0: i32, %arg1: memref<8xi32, #tpu.memory_space<smem>>) -> (i32, i32) {
    %c0_i32 = arith.constant 0 : i32
    %c0_i32_0 = arith.constant 0 : i32
    %c0_i32_1 = arith.constant 0 : i32
    return %c0_i32, %c0_i32_0 : i32, i32
  }
  func.func @transform_2(%arg0: i32, %arg1: memref<8xi32, #tpu.memory_space<smem>>) -> (i32, i32, i32) {
    %c0_i32 = arith.constant 0 : i32
    %c0_i32_0 = arith.constant 0 : i32
    %c0_i32_1 = arith.constant 0 : i32
    %c0_i32_2 = arith.constant 0 : i32
    return %c0_i32, %c0_i32_0, %c0_i32_1 : i32, i32, i32
  }
  func.func @transform_3(%arg0: i32, %arg1: memref<8xi32, #tpu.memory_space<smem>>) -> (i32, i32, i32) {
    %c0_i32 = arith.constant 0 : i32
    %c0_i32_0 = arith.constant 0 : i32
    %c0_i32_1 = arith.constant 0 : i32
    %c0_i32_2 = arith.constant 0 : i32
    return %c0_i32, %c0_i32_0, %c0_i32_1 : i32, i32, i32
  }
  func.func @transform_4(%arg0: i32, %arg1: memref<8xi32, #tpu.memory_space<smem>>) -> (i32, i32, i32) {
    %c0_i32 = arith.constant 0 : i32
    %c0_i32_0 = arith.constant 0 : i32
    %c0_i32_1 = arith.constant 0 : i32
    %c0_i32_2 = arith.constant 0 : i32
    return %c0_i32, %c0_i32_0, %c0_i32_1 : i32, i32, i32
  }
  func.func @transform_5(%arg0: i32, %arg1: memref<8xi32, #tpu.memory_space<smem>>) -> (i32, i32, i32) {
    %c0_i32 = arith.constant 0 : i32
    %c0_i32_0 = arith.constant 0 : i32
    %c0_i32_1 = arith.constant 0 : i32
    %c0_i32_2 = arith.constant 0 : i32
    return %c0_i32, %c0_i32_0, %c0_i32_1 : i32, i32, i32
  }
  func.func @transform_6(%arg0: i32, %arg1: memref<8xi32, #tpu.memory_space<smem>>) -> (i32, i32) {
    %c0_i32 = arith.constant 0 : i32
    %c0_i32_0 = arith.constant 0 : i32
    %c0_i32_1 = arith.constant 0 : i32
    return %c0_i32, %c0_i32_0 : i32, i32
  }
  func.func @transform_7(%arg0: i32, %arg1: memref<8xi32, #tpu.memory_space<smem>>) -> (i32, i32) {
    %c0_i32 = arith.constant 0 : i32
    %c0_i32_0 = arith.constant 0 : i32
    %c0_i32_1 = arith.constant 0 : i32
    return %c0_i32, %c0_i32_0 : i32, i32
  }
  func.func @transform_8(%arg0: i32, %arg1: memref<8xi32, #tpu.memory_space<smem>>) -> (i32, i32, i32) {
    %c0_i32 = arith.constant 0 : i32
    %c0_i32_0 = arith.constant 0 : i32
    %c0_i32_1 = arith.constant 0 : i32
    return %arg0, %c0_i32, %c0_i32_0 : i32, i32, i32
  }
  func.func @transform_9(%arg0: i32, %arg1: memref<8xi32, #tpu.memory_space<smem>>) -> (i32, i32, i32) {
    %c0_i32 = arith.constant 0 : i32
    %c0_i32_0 = arith.constant 0 : i32
    %c0_i32_1 = arith.constant 0 : i32
    %c0_i32_2 = arith.constant 0 : i32
    return %c0_i32, %c0_i32_0, %c0_i32_1 : i32, i32, i32
  }
}

</mosaic_0001>

<llo_original>
// kernel: tpu_custom_call.1
$region0: #{tpu_custom_call.1}
  #allocation0 [shape = 'u32[]', space=smem, size = 0x4, offset = 0x4, fixed_abs, tag = 'smem constant byte address 0x4 - core index']
  #allocation1 [shape = 'u32[144,128]{1,0:T(1,128)}', space=vmem, size = 0x12000, scoped, tag = 'internal scratch']
  #allocation2 [shape = 'f32[2,1,32]{2,1,0:T(1,128)}', space=vmem, size = 0x400, scoped, tag = 'scratch operand']
  #allocation3 [shape = 's32[1]{0}', space=sflag, size = 0x4, scoped, tag = 'scoped memory for tpu_custom_call.1']
  #allocation4 [shape = 'u8[512]{0}', space=smem, size = 0x200, scoped, tag = 'prefetched SMEM operand 0']
  %s0 = inlined_call_operand.hbm [shape: s32[8], index: 0, kind: input, shape index: {}]
  %s1 = inlined_call_operand.vmem [shape: f32[2,1,32], index: 1, kind: input, shape index: {}]
  %s2 = inlined_call_operand.hbm [shape: f32[16,32], index: 2, kind: input, shape index: {}]
  %s3 = inlined_call_operand.hbm [shape: f32[2,32,96], index: 3, kind: input, shape index: {}]
  %s4 = inlined_call_operand.hbm [shape: f32[2,32,96], index: 4, kind: input, shape index: {}]
  %s5 = inlined_call_operand.vmem [shape: f32[2,1,96], index: 5, kind: input, shape index: {}]
  %s6 = inlined_call_operand.vmem [shape: f32[2,1,32], index: 6, kind: input, shape index: {}]
  %s7 = inlined_call_operand.hbm [shape: f32[32,128], index: 7, kind: input, shape index: {}]
  %s8 = inlined_call_operand.vmem [shape: f32[1,128], index: 8, kind: input, shape index: {}]
  %s9 = inlined_call_operand.hbm [shape: f32[8,1,128], index: 9, kind: output, shape index: {0}]
  %s10 = inlined_call_operand.hbm [shape: f32[2,1,32], index: 10, kind: output, shape index: {1}]
  %11 = xla_tuple %s9, %s10
  %s12 = sld [smem:[#allocation0]]
  $region97: #{tpu_custom_call.1} parent=0
    _
  %s14 = ssub.s32 1, %s12
  %s15 = scalar_select 0, %s14, %s12
  %17 = dma.hbm_to_smem %s0, 16, [#allocation4], [#allocation3]
  %18 = dma.done [#allocation3], 16
  %19 = sfence
  $region1: #{tpu_custom_call.1} parent=0
    #allocation5 [shape = 'u8[8192]{0}', space=vmem, size = 0x2000, scoped, tag = 'input window, operand 2, single buffered']
    #allocation6 [shape = 's32[2]{0}', space=sflag, size = 0x8, scoped, tag = 'scoped memory for tpu_custom_call.1']
    #allocation7 [shape = 's32[2]{0}', space=sflag, size = 0x8, scoped, tag = 'scoped memory for tpu_custom_call.1']
    #allocation8 [shape = 'u8[32768]{0}', space=vmem, size = 0x8000, scoped, tag = 'input window, operand 3, single buffered']
    #allocation9 [shape = 's32[1]{0}', space=sflag, size = 0x4, scoped, tag = 'scoped memory for tpu_custom_call.1']
    #allocation10 [shape = 'u8[32768]{0}', space=vmem, size = 0x8000, scoped, tag = 'input window, operand 4, single buffered']
    #allocation11 [shape = 'u8[16384]{0}', space=vmem, size = 0x4000, scoped, tag = 'input window, operand 7, single buffered']
    #allocation12 [shape = 's32[1]{0}', space=sflag, size = 0x4, scoped, tag = 'scoped memory for tpu_custom_call.1']
    #allocation13 [shape = 'u8[1024]{0}', space=vmem, size = 0x400, scoped, tag = 'output window, operand 0']
    #allocation14 [shape = 'u8[1024]{0}', space=vmem, size = 0x400, scoped, tag = 'output window, operand 1, single buffered']
    #allocation15 [shape = 's32[1]{0}', space=sflag, size = 0x4, scoped, tag = 'scoped memory for tpu_custom_call.1']
    %20 = vsyncpa [#allocation6], 0
    %21 = vsyncpa [#allocation9], 0
    %22 = vsyncpa [#allocation12], 0
    %23 = vsyncpa [#allocation7], 0
    %s24 = scalar_lea.sflag [#allocation7], 1
    %25 = vsyncpa %s24, 0
    %26 = vsyncpa [#allocation15], 0
    loop: start=0, step=1, limit=10
    $region2: #{tpu_custom_call.1} parent=1 // loop_pre_header
      _
    $region3: #{tpu_custom_call.1} parent=1 // loop_header
      %s28 = sphi 0, %s32
      %p29 = scmp.ge.s32.totalorder %s28, 10
      %s36 = sphi 0, %s36
      %s38 = sphi 0, %s36
      %s39 = sphi 0, %s38
      %s53 = sphi 0, %s39
      %s57 = sphi 0, %s57
      %s59 = sphi 0, %s57
      %s60 = sphi 0, %s59
      %s74 = sphi 0, %s60
      %s78 = sphi 0, %s78
      %s80 = sphi 0, %s78
      %s81 = sphi 0, %s80
      %s95 = sphi 0, %s81
      %s99 = sphi 0, %s99
      %s101 = sphi 0, %s99
      %s102 = sphi 0, %s101
      %s116 = sphi 0, %s102
      %s120 = sphi 0, %s120
      %s122 = sphi 0, %s120
      %s123 = sphi 0, %s122
      %s137 = sphi 0, %s123
      %s141 = sphi 0, %s141
      %s143 = sphi 0, %s141
      %s144 = sphi 0, %s143
      %s158 = sphi 0, %s144
      %s162 = sphi 0, %s162
      %s164 = sphi 0, %s162
      %s165 = sphi 0, %s164
      %s179 = sphi 0, %s165
      %s183 = sphi 0, %s183
      %s185 = sphi 0, %s183
      %s186 = sphi 0, %s185
      %s200 = sphi 0, %s186
      %s206 = sphi 0, %s208
      %s209 = sphi 0, %s206
      %s210 = sphi 0, %s209
      %s226 = sphi 0, %s210
      %s230 = sphi 0, %s230
      %s232 = sphi 0, %s230
      %s233 = sphi 0, %s232
      %s247 = sphi 0, %s233
    $region4: #{tpu_custom_call.1} parent=1 // loop_header_branch
      %31 = sbr.rel (%p29) target = $region8
    $region5: #{tpu_custom_call.1} parent=1 // loop_body
      %s33 = ssub.s32 %s28, 1
      %s34 = ssub.s32 %s28, 2
      %s35 = sadd.s32 %s28, 1
      %s37 = sadd.s32 %s36, 1
      %p40 = scmp.eq.s32.totalorder %s28, 7
      %p41 = scmp.ne.s32.totalorder %s36, %s38
      %p42 = scmp.eq.s32.totalorder %s28, 0
      %p43 = por %p41, %p42
      %p44 = scmp.ne.s32.totalorder %s36, %s38
      %p45 = scmp.eq.s32.totalorder %s33, 7
      %p46 = por %p44, %p45
      %p47 = scmp.ne.s32.totalorder %s38, %s39
      %p48 = scmp.eq.s32.totalorder %s33, 0
      %p49 = por %p47, %p48
      %p50 = scmp.ne.s32.totalorder %s38, %s39
      %p51 = scmp.eq.s32.totalorder %s34, 7
      %p52 = por %p50, %p51
      %p54 = scmp.ne.s32.totalorder %s39, %s53
      %p55 = scmp.eq.s32.totalorder %s34, 0
      %p56 = por %p54, %p55
      %s58 = sadd.s32 %s57, 1
      %p61 = scmp.eq.s32.totalorder %s28, 7
      %p62 = scmp.ne.s32.totalorder %s57, %s59
      %p63 = scmp.eq.s32.totalorder %s28, 0
      %p64 = por %p62, %p63
      %p65 = scmp.ne.s32.totalorder %s57, %s59
      %p66 = scmp.eq.s32.totalorder %s33, 7
      %p67 = por %p65, %p66
      %p68 = scmp.ne.s32.totalorder %s59, %s60
      %p69 = scmp.eq.s32.totalorder %s33, 0
      %p70 = por %p68, %p69
      %p71 = scmp.ne.s32.totalorder %s59, %s60
      %p72 = scmp.eq.s32.totalorder %s34, 7
      %p73 = por %p71, %p72
      %p75 = scmp.ne.s32.totalorder %s60, %s74
      %p76 = scmp.eq.s32.totalorder %s34, 0
      %p77 = por %p75, %p76
      %s79 = sadd.s32 %s78, 1
      %p82 = scmp.eq.s32.totalorder %s28, 7
      %p83 = scmp.ne.s32.totalorder %s78, %s80
      %p84 = scmp.eq.s32.totalorder %s28, 0
      %p85 = por %p83, %p84
      %p86 = scmp.ne.s32.totalorder %s78, %s80
      %p87 = scmp.eq.s32.totalorder %s33, 7
      %p88 = por %p86, %p87
      %p89 = scmp.ne.s32.totalorder %s80, %s81
      %p90 = scmp.eq.s32.totalorder %s33, 0
      %p91 = por %p89, %p90
      %p92 = scmp.ne.s32.totalorder %s80, %s81
      %p93 = scmp.eq.s32.totalorder %s34, 7
      %p94 = por %p92, %p93
      %p96 = scmp.ne.s32.totalorder %s81, %s95
      %p97 = scmp.eq.s32.totalorder %s34, 0
      %p98 = por %p96, %p97
      %s100 = sadd.s32 %s99, 1
      %p103 = scmp.eq.s32.totalorder %s28, 7
      %p104 = scmp.ne.s32.totalorder %s99, %s101
      %p105 = scmp.eq.s32.totalorder %s28, 0
      %p106 = por %p104, %p105
      %p107 = scmp.ne.s32.totalorder %s99, %s101
      %p108 = scmp.eq.s32.totalorder %s33, 7
      %p109 = por %p107, %p108
      %p110 = scmp.ne.s32.totalorder %s101, %s102
      %p111 = scmp.eq.s32.totalorder %s33, 0
      %p112 = por %p110, %p111
      %p113 = scmp.ne.s32.totalorder %s101, %s102
      %p114 = scmp.eq.s32.totalorder %s34, 7
      %p115 = por %p113, %p114
      %p117 = scmp.ne.s32.totalorder %s102, %s116
      %p118 = scmp.eq.s32.totalorder %s34, 0
      %p119 = por %p117, %p118
      %s121 = sadd.s32 %s120, 1
      %p124 = scmp.eq.s32.totalorder %s28, 7
      %p125 = scmp.ne.s32.totalorder %s120, %s122
      %p126 = scmp.eq.s32.totalorder %s28, 0
      %p127 = por %p125, %p126
      %p128 = scmp.ne.s32.totalorder %s120, %s122
      %p129 = scmp.eq.s32.totalorder %s33, 7
      %p130 = por %p128, %p129
      %p131 = scmp.ne.s32.totalorder %s122, %s123
      %p132 = scmp.eq.s32.totalorder %s33, 0
      %p133 = por %p131, %p132
      %p134 = scmp.ne.s32.totalorder %s122, %s123
      %p135 = scmp.eq.s32.totalorder %s34, 7
      %p136 = por %p134, %p135
      %p138 = scmp.ne.s32.totalorder %s123, %s137
      %p139 = scmp.eq.s32.totalorder %s34, 0
      %p140 = por %p138, %p139
      %s142 = sadd.s32 %s141, 1
      %p145 = scmp.eq.s32.totalorder %s28, 7
      %p146 = scmp.ne.s32.totalorder %s141, %s143
      %p147 = scmp.eq.s32.totalorder %s28, 0
      %p148 = por %p146, %p147
      %p149 = scmp.ne.s32.totalorder %s141, %s143
      %p150 = scmp.eq.s32.totalorder %s33, 7
      %p151 = por %p149, %p150
      %p152 = scmp.ne.s32.totalorder %s143, %s144
      %p153 = scmp.eq.s32.totalorder %s33, 0
      %p154 = por %p152, %p153
      %p155 = scmp.ne.s32.totalorder %s143, %s144
      %p156 = scmp.eq.s32.totalorder %s34, 7
      %p157 = por %p155, %p156
      %p159 = scmp.ne.s32.totalorder %s144, %s158
      %p160 = scmp.eq.s32.totalorder %s34, 0
      %p161 = por %p159, %p160
      %s163 = sadd.s32 %s162, 1
      %p166 = scmp.eq.s32.totalorder %s28, 7
      %p167 = scmp.ne.s32.totalorder %s162, %s164
      %p168 = scmp.eq.s32.totalorder %s28, 0
      %p169 = por %p167, %p168
      %p170 = scmp.ne.s32.totalorder %s162, %s164
      %p171 = scmp.eq.s32.totalorder %s33, 7
      %p172 = por %p170, %p171
      %p173 = scmp.ne.s32.totalorder %s164, %s165
      %p174 = scmp.eq.s32.totalorder %s33, 0
      %p175 = por %p173, %p174
      %p176 = scmp.ne.s32.totalorder %s164, %s165
      %p177 = scmp.eq.s32.totalorder %s34, 7
      %p178 = por %p176, %p177
      %p180 = scmp.ne.s32.totalorder %s165, %s179
      %p181 = scmp.eq.s32.totalorder %s34, 0
      %p182 = por %p180, %p181
      %s184 = sadd.s32 %s183, 1
      %p187 = scmp.eq.s32.totalorder %s28, 7
      %p188 = scmp.ne.s32.totalorder %s183, %s185
      %p189 = scmp.eq.s32.totalorder %s28, 0
      %p190 = por %p188, %p189
      %p191 = scmp.ne.s32.totalorder %s183, %s185
      %p192 = scmp.eq.s32.totalorder %s33, 7
      %p193 = por %p191, %p192
      %p194 = scmp.ne.s32.totalorder %s185, %s186
      %p195 = scmp.eq.s32.totalorder %s33, 0
      %p196 = por %p194, %p195
      %p197 = scmp.ne.s32.totalorder %s185, %s186
      %p198 = scmp.eq.s32.totalorder %s34, 7
      %p199 = por %p197, %p198
      %p201 = scmp.ne.s32.totalorder %s186, %s200
      %p202 = scmp.eq.s32.totalorder %s34, 0
      %p203 = por %p201, %p202
      %s204 = ssub.s32 %s28, %s35
      %p205 = scmp.eq.s32.totalorder %s204, 0
      %s207 = sadd.s32 %s206, 1
      %s208 = scalar_select %p205, %s206, %s207
      %p211 = pneg %p205
      %p212 = scmp.eq.s32.totalorder %s28, 7
      %p213 = por %p211, %p212
      %p214 = scmp.ne.s32.totalorder %s206, %s209
      %p215 = scmp.eq.s32.totalorder %s28, 0
      %p216 = por %p214, %p215
      %p217 = scmp.ne.s32.totalorder %s206, %s209
      %p218 = scmp.eq.s32.totalorder %s33, 7
      %p219 = por %p217, %p218
      %p220 = scmp.ne.s32.totalorder %s209, %s210
      %p221 = scmp.eq.s32.totalorder %s33, 0
      %p222 = por %p220, %p221
      %p223 = scmp.ne.s32.totalorder %s209, %s210
      %p224 = scmp.eq.s32.totalorder %s34, 7
      %p225 = por %p223, %p224
      %p227 = scmp.ne.s32.totalorder %s210, %s226
      %p228 = scmp.eq.s32.totalorder %s34, 0
      %p229 = por %p227, %p228
      %s231 = sadd.s32 %s230, 1
      %p234 = scmp.eq.s32.totalorder %s28, 7
      %p235 = scmp.ne.s32.totalorder %s230, %s232
      %p236 = scmp.eq.s32.totalorder %s28, 0
      %p237 = por %p235, %p236
      %p238 = scmp.ne.s32.totalorder %s230, %s232
      %p239 = scmp.eq.s32.totalorder %s33, 7
      %p240 = por %p238, %p239
      %p241 = scmp.ne.s32.totalorder %s232, %s233
      %p242 = scmp.eq.s32.totalorder %s33, 0
      %p243 = por %p241, %p242
      %p244 = scmp.ne.s32.totalorder %s232, %s233
      %p245 = scmp.eq.s32.totalorder %s34, 7
      %p246 = por %p244, %p245
      %p248 = scmp.ne.s32.totalorder %s233, %s247
      %p249 = scmp.eq.s32.totalorder %s34, 0
      %p250 = por %p248, %p249
      %p251 = scmp.le.s32.totalorder 1, %s28
      %p252 = scmp.lt.s32.totalorder %s28, 9
      %p253 = pnand %p251, %p252
      %p254 = pneg %p253
      // Predicated region
      $region9: #{tpu_custom_call.1} parent=5 // pred_check
        _
      $region10: #{tpu_custom_call.1} parent=5 // pred_check_branch
        %256 = sbr.rel (%p253) target = $region12
      $region11: #{tpu_custom_call.1} parent=5 // pred_region
        %s257 = ssub.s32 %s28, 1
        // Predicated region
        $region13: #{tpu_custom_call.1} parent=11 // pred_check
          %p258 = pneg %p49
        $region14: #{tpu_custom_call.1} parent=11 // pred_check_branch
          %260 = sbr.rel (%p258) target = $region16
        $region15: #{tpu_custom_call.1} parent=11 // pred_region
          _
        $region16: #{tpu_custom_call.1} parent=11 // pred_fallthru
          _
        // Predicated region
        $region17: #{tpu_custom_call.1} parent=11 // pred_check
          %p261 = pneg %p70
        $region18: #{tpu_custom_call.1} parent=11 // pred_check_branch
          %263 = sbr.rel (%p261) target = $region20
        $region19: #{tpu_custom_call.1} parent=11 // pred_region
          %s265 = ssub.s32 256, 256
          %266 = vsyncadd [#allocation6], %s265
          %s267 = sshll.u32 [#allocation5], 4
          %s268 = int_to_ptr.vmem [resolvable:$true] %s267
          %273 = dma.hbm_to_vmem [thread:$0]  %s2, 256, %s268, [#allocation6], 128, 128, 8
        $region20: #{tpu_custom_call.1} parent=11 // pred_fallthru
          _
        // Predicated region
        $region21: #{tpu_custom_call.1} parent=11 // pred_check
          %p274 = pneg %p91
        $region22: #{tpu_custom_call.1} parent=11 // pred_check_branch
          %276 = sbr.rel (%p274) target = $region24
        $region23: #{tpu_custom_call.1} parent=11 // pred_region
          %s278 = ssub.s32 1024, 1024
          %279 = vsyncadd [#allocation9], %s278
          %s280 = sshll.u32 [#allocation8], 4
          %s281 = int_to_ptr.vmem [resolvable:$true] %s280
          %286 = dma.hbm_to_vmem [thread:$0]  %s3, 1024, %s281, [#allocation9], 128, 128, 8
        $region24: #{tpu_custom_call.1} parent=11 // pred_fallthru
          _
        // Predicated region
        $region25: #{tpu_custom_call.1} parent=11 // pred_check
          %p287 = pneg %p112
        $region26: #{tpu_custom_call.1} parent=11 // pred_check_branch
          %289 = sbr.rel (%p287) target = $region28
        $region27: #{tpu_custom_call.1} parent=11 // pred_region
          %s291 = ssub.s32 1024, 1024
          %292 = vsyncadd [#allocation9], %s291
          %s293 = sshll.u32 [#allocation10], 4
          %s294 = int_to_ptr.vmem [resolvable:$true] %s293
          %299 = dma.hbm_to_vmem [thread:$0]  %s4, 1024, %s294, [#allocation9], 128, 128, 8
        $region28: #{tpu_custom_call.1} parent=11 // pred_fallthru
          _
        // Predicated region
        $region29: #{tpu_custom_call.1} parent=11 // pred_check
          %p300 = pneg %p133
        $region30: #{tpu_custom_call.1} parent=11 // pred_check_branch
          %302 = sbr.rel (%p300) target = $region32
        $region31: #{tpu_custom_call.1} parent=11 // pred_region
          _
        $region32: #{tpu_custom_call.1} parent=11 // pred_fallthru
          _
        // Predicated region
        $region33: #{tpu_custom_call.1} parent=11 // pred_check
          %p303 = pneg %p154
        $region34: #{tpu_custom_call.1} parent=11 // pred_check_branch
          %305 = sbr.rel (%p303) target = $region36
        $region35: #{tpu_custom_call.1} parent=11 // pred_region
          _
        $region36: #{tpu_custom_call.1} parent=11 // pred_fallthru
          _
        // Predicated region
        $region37: #{tpu_custom_call.1} parent=11 // pred_check
          %p306 = pneg %p175
        $region38: #{tpu_custom_call.1} parent=11 // pred_check_branch
          %308 = sbr.rel (%p306) target = $region40
        $region39: #{tpu_custom_call.1} parent=11 // pred_region
          %s310 = ssub.s32 512, 512
          %311 = vsyncadd [#allocation12], %s310
          %s312 = sshll.u32 [#allocation11], 4
          %s313 = int_to_ptr.vmem [resolvable:$true] %s312
          %318 = dma.hbm_to_vmem [thread:$0]  %s7, 512, %s313, [#allocation12], 128, 128, 8
        $region40: #{tpu_custom_call.1} parent=11 // pred_fallthru
          _
        // Predicated region
        $region41: #{tpu_custom_call.1} parent=11 // pred_check
          %p319 = pneg %p196
        $region42: #{tpu_custom_call.1} parent=11 // pred_check_branch
          %321 = sbr.rel (%p319) target = $region44
        $region43: #{tpu_custom_call.1} parent=11 // pred_region
          _
        $region44: #{tpu_custom_call.1} parent=11 // pred_fallthru
          _
      $region12: #{tpu_custom_call.1} parent=5 // pred_fallthru
        _
      %p322 = scmp.lt.s32.totalorder %s28, 8
      // Predicated region
      $region45: #{tpu_custom_call.1} parent=5 // pred_check
        %p323 = pneg %p322
      $region46: #{tpu_custom_call.1} parent=5 // pred_check_branch
        %325 = sbr.rel (%p323) target = $region48
      $region47: #{tpu_custom_call.1} parent=5 // pred_region
        _
      $region48: #{tpu_custom_call.1} parent=5 // pred_fallthru
        _
      %p326 = scmp.le.s32.totalorder 1, %s28
      %p327 = scmp.lt.s32.totalorder %s28, 9
      %p328 = pnand %p326, %p327
      %p329 = pneg %p328
      // Predicated region
      $region49: #{tpu_custom_call.1} parent=5 // pred_check
        _
      $region50: #{tpu_custom_call.1} parent=5 // pred_check_branch
        %331 = sbr.rel (%p328) target = $region52
      $region51: #{tpu_custom_call.1} parent=5 // pred_region
        %s332 = ssub.s32 %s28, 1
        // Predicated region
        $region53: #{tpu_custom_call.1} parent=51 // pred_check
          %p333 = pneg %p70
        $region54: #{tpu_custom_call.1} parent=51 // pred_check_branch
          %335 = sbr.rel (%p333) target = $region56
        $region55: #{tpu_custom_call.1} parent=51 // pred_region
          %336 = dma.done [#allocation6], 256
        $region56: #{tpu_custom_call.1} parent=51 // pred_fallthru
          _
        // Predicated region
        $region57: #{tpu_custom_call.1} parent=51 // pred_check
          %p337 = pneg %p91
        $region58: #{tpu_custom_call.1} parent=51 // pred_check_branch
          %339 = sbr.rel (%p337) target = $region60
        $region59: #{tpu_custom_call.1} parent=51 // pred_region
          %340 = dma.done [#allocation9], 1024
        $region60: #{tpu_custom_call.1} parent=51 // pred_fallthru
          _
        // Predicated region
        $region61: #{tpu_custom_call.1} parent=51 // pred_check
          %p341 = pneg %p112
        $region62: #{tpu_custom_call.1} parent=51 // pred_check_branch
          %343 = sbr.rel (%p341) target = $region64
        $region63: #{tpu_custom_call.1} parent=51 // pred_region
          %344 = dma.done [#allocation9], 1024
        $region64: #{tpu_custom_call.1} parent=51 // pred_fallthru
          _
        // Predicated region
        $region65: #{tpu_custom_call.1} parent=51 // pred_check
          %p345 = pneg %p175
        $region66: #{tpu_custom_call.1} parent=51 // pred_check_branch
          %347 = sbr.rel (%p345) target = $region68
        $region67: #{tpu_custom_call.1} parent=51 // pred_region
          %348 = dma.done [#allocation12], 512
        $region68: #{tpu_custom_call.1} parent=51 // pred_fallthru
          _
        %p349 = pneg %p49
        %p350 = pneg %p46
        %p351 = pneg %p70
        %p352 = pneg %p67
        %p353 = pneg %p91
        %p354 = pneg %p88
        %p355 = pneg %p112
        %p356 = pneg %p109
        %p357 = pneg %p133
        %p358 = pneg %p130
        %p359 = pneg %p154
        %p360 = pneg %p151
        %p361 = pneg %p175
        %p362 = pneg %p172
        %p363 = pneg %p196
        %p364 = pneg %p193
        %p365 = pneg %p222
        %p366 = pneg %p219
        %s367 = sand.u32 %s209, 1
        %s368 = scalar_lea.sflag [#allocation7], %s367
        %s369 = sand.u32 %s209, 1
        %s370 = scalar_lea.vmem [#allocation13], %s369
        %p371 = pneg %p243
        %p372 = pneg %p240
        %p373 = scmp.eq.s32.totalorder %s33, 0
        // Predicated region
        $region69: #{tpu_custom_call.1} parent=51 // pred_check
          %p374 = pneg %p373
        $region70: #{tpu_custom_call.1} parent=51 // pred_check_branch
          %376 = sbr.rel (%p374) target = $region72
        $region71: #{tpu_custom_call.1} parent=51 // pred_region
          %v377 = vld [vmem:[%s1] sm:$0x1]
          %v378 = vld [vmem:[%s1 + $0x1] sm:$0x1]
          %vm379 = vcmask 253952
          %380 = vst.msk [vmem:[#allocation2] sm:$0x1] %vm379, %v377
          %381 = vst.msk [vmem:[#allocation2 + $0x1] sm:$0x1] %vm379, %v378
        $region72: #{tpu_custom_call.1} parent=51 // pred_fallthru
          _
        %s382 = sld [smem:[#allocation4 + %s33]]
        %s383 = scalar_lea.vmem [#allocation5], %s382
        %v384 = vld [vmem:[%s383] sm:$0x1]
        %v385 = vld [vmem:[#allocation2] sm:$0x1]
        %v386 = vld [vmem:[#allocation8] sm:$0xff]
        %v387 = vld [vmem:[#allocation8 + $0x8] sm:$0xff]
        %v388 = vld [vmem:[#allocation8 + $0x10] sm:$0xff]
        %v389 = vld [vmem:[#allocation8 + $0x18] sm:$0xff]
        %v390 = vld [vmem:[%s5] sm:$0x1]
        %vm391 = vcmask 261120
        %v393 = vsel %vm391, %v384, 0
        %395 = vmatprep.subr.mxu0 0.0
        %396 = vmatpush1.msra.mxu0 %v386
        %397 = vmatprep.subr.mxu0 0.0
        %398 = vmatpush1.msra.mxu0 %v387
        %399 = vmatprep.subr.mxu0 0.0
        %400 = vmatpush1.msra.mxu0 %v388
        %401 = vmatprep.subr.mxu0 0.0
        %402 = vmatpush1.msra.mxu0 %v389
        %403 = vmatprep.subr.mxu0 0.0
        %404 = vmatpush1.msra.mxu0 0.0
        %405 = vmatprep.subr.mxu0 0.0
        %406 = vmatpush1.msra.mxu0 0.0
        %407 = vmatprep.subr.mxu0 0.0
        %408 = vmatpush1.msra.mxu0 0.0
        %409 = vmatprep.subr.mxu0 0.0
        %410 = vmatpush1.msra.mxu0 0.0
        %411 = vmatprep.subr.mxu0 0.0
        %412 = vmatpush1.msra.mxu0 0.0
        %413 = vmatprep.subr.mxu0 0.0
        %414 = vmatpush1.msra.mxu0 0.0
        %415 = vmatprep.subr.mxu0 0.0
        %416 = vmatpush1.msra.mxu0 0.0
        %417 = vmatprep.subr.mxu0 0.0
        %418 = vmatpush1.msra.mxu0 0.0
        %419 = vmatprep.subr.mxu0 0.0
        %420 = vmatpush1.msra.mxu0 0.0
        %421 = vmatprep.subr.mxu0 0.0
        %422 = vmatpush1.msra.mxu0 0.0
        %423 = vmatprep.subr.mxu0 0.0
        %424 = vmatpush1.msra.mxu0 0.0
        %425 = vmatprep.subr.mxu0 0.0
        %426 = vmatpush1.msra.mxu0 0.0
        %427 = vmatprep.subr.mxu0 0.0
        %428 = vmatpush1.msra.mxu0 0.0
        %429 = vmatprep.subr.mxu0 0.0
        %430 = vmatpush1.msra.mxu0 0.0
        %431 = vmatprep.subr.mxu0 0.0
        %432 = vmatpush1.msra.mxu0 0.0
        %433 = vmatprep.subr.mxu0 0.0
        %434 = vmatpush1.msra.mxu0 0.0
        %435 = vmatprep.subr.mxu0 0.0
        %436 = vmatpush1.msra.mxu0 0.0
        %437 = vmatprep.subr.mxu0 0.0
        %438 = vmatpush1.msra.mxu0 0.0
        %439 = vmatprep.subr.mxu0 0.0
        %440 = vmatpush1.msra.mxu0 0.0
        %441 = vmatprep.subr.mxu0 0.0
        %442 = vmatpush1.msra.mxu0 0.0
        %443 = vmatprep.subr.mxu0 0.0
        %444 = vmatpush1.msra.mxu0 0.0
        %445 = vmatprep.subr.mxu0 0.0
        %446 = vmatpush1.msra.mxu0 0.0
        %447 = vmatprep.subr.mxu0 0.0
        %448 = vmatpush1.msra.mxu0 0.0
        %449 = vmatprep.subr.mxu0 0.0
        %450 = vmatpush1.msra.mxu0 0.0
        %451 = vmatprep.subr.mxu0 0.0
        %452 = vmatpush1.msra.mxu0 0.0
        %453 = vmatprep.subr.mxu0 0.0
        %454 = vmatpush1.msra.mxu0 0.0
        %455 = vmatprep.subr.mxu0 0.0
        %456 = vmatpush1.msra.mxu0 0.0
        %457 = vmatprep.subr.mxu0 0.0
        %458 = vmatpush1.msra.mxu0 0.0
        %459 = vmatprep.mubr.f32.mxu0 0.0
        %460 = vmatmul.mubr.f32.gmra.mrb[0].mxu0 %v393
        %v461 = vpop.f32.mrb[0].mxu0
        %v462 = vadd.f32 %v390, %v461
        %v463 = vpop.f32.mrb[0].mxu0
        %464 = vdwg.mxu0
        %v465 = vld [vmem:[#allocation10] sm:$0xff]
        %v466 = vld [vmem:[#allocation10 + $0x8] sm:$0xff]
        %v467 = vld [vmem:[#allocation10 + $0x10] sm:$0xff]
        %v468 = vld [vmem:[#allocation10 + $0x18] sm:$0xff]
        %v470 = vsel %vm391, %v385, 0
        %472 = vmatprep.subr.mxu0 0.0
        %473 = vmatpush1.msra.mxu0 %v465
        %474 = vmatprep.subr.mxu0 0.0
        %475 = vmatpush1.msra.mxu0 %v466
        %476 = vmatprep.subr.mxu0 0.0
        %477 = vmatpush1.msra.mxu0 %v467
        %478 = vmatprep.subr.mxu0 0.0
        %479 = vmatpush1.msra.mxu0 %v468
        %480 = vmatprep.subr.mxu0 0.0
        %481 = vmatpush1.msra.mxu0 0.0
        %482 = vmatprep.subr.mxu0 0.0
        %483 = vmatpush1.msra.mxu0 0.0
        %484 = vmatprep.subr.mxu0 0.0
        %485 = vmatpush1.msra.mxu0 0.0
        %486 = vmatprep.subr.mxu0 0.0
        %487 = vmatpush1.msra.mxu0 0.0
        %488 = vmatprep.subr.mxu0 0.0
        %489 = vmatpush1.msra.mxu0 0.0
        %490 = vmatprep.subr.mxu0 0.0
        %491 = vmatpush1.msra.mxu0 0.0
        %492 = vmatprep.subr.mxu0 0.0
        %493 = vmatpush1.msra.mxu0 0.0
        %494 = vmatprep.subr.mxu0 0.0
        %495 = vmatpush1.msra.mxu0 0.0
        %496 = vmatprep.subr.mxu0 0.0
        %497 = vmatpush1.msra.mxu0 0.0
        %498 = vmatprep.subr.mxu0 0.0
        %499 = vmatpush1.msra.mxu0 0.0
        %500 = vmatprep.subr.mxu0 0.0
        %501 = vmatpush1.msra.mxu0 0.0
        %502 = vmatprep.subr.mxu0 0.0
        %503 = vmatpush1.msra.mxu0 0.0
        %504 = vmatprep.subr.mxu0 0.0
        %505 = vmatpush1.msra.mxu0 0.0
        %506 = vmatprep.subr.mxu0 0.0
        %507 = vmatpush1.msra.mxu0 0.0
        %508 = vmatprep.subr.mxu0 0.0
        %509 = vmatpush1.msra.mxu0 0.0
        %510 = vmatprep.subr.mxu0 0.0
        %511 = vmatpush1.msra.mxu0 0.0
        %512 = vmatprep.subr.mxu0 0.0
        %513 = vmatpush1.msra.mxu0 0.0
        %514 = vmatprep.subr.mxu0 0.0
        %515 = vmatpush1.msra.mxu0 0.0
        %516 = vmatprep.subr.mxu0 0.0
        %517 = vmatpush1.msra.mxu0 0.0
        %518 = vmatprep.subr.mxu0 0.0
        %519 = vmatpush1.msra.mxu0 0.0
        %520 = vmatprep.subr.mxu0 0.0
        %521 = vmatpush1.msra.mxu0 0.0
        %522 = vmatprep.subr.mxu0 0.0
        %523 = vmatpush1.msra.mxu0 0.0
        %524 = vmatprep.subr.mxu0 0.0
        %525 = vmatpush1.msra.mxu0 0.0
        %526 = vmatprep.subr.mxu0 0.0
        %527 = vmatpush1.msra.mxu0 0.0
        %528 = vmatprep.subr.mxu0 0.0
        %529 = vmatpush1.msra.mxu0 0.0
        %530 = vmatprep.subr.mxu0 0.0
        %531 = vmatpush1.msra.mxu0 0.0
        %532 = vmatprep.subr.mxu0 0.0
        %533 = vmatpush1.msra.mxu0 0.0
        %534 = vmatprep.subr.mxu0 0.0
        %535 = vmatpush1.msra.mxu0 0.0
        %536 = vmatprep.mubr.f32.mxu0 0.0
        %537 = vmatmul.mubr.f32.gmra.mrb[0].mxu0 %v470
        %v538 = vpop.f32.mrb[0].mxu0
        %v539 = vadd.f32 0.0, %v538
        %v540 = vpop.f32.mrb[0].mxu0
        %541 = vdwg.mxu0
        %v542 = vadd.f32 %v462, %v539
        %v543 = vxor.u32 %v542, 2147483648
        %v544 = vmul.f32 %v543, 1.442695
        %v545 = vpow.pop %v544
        %v546 = vadd.f32 %v545, 1.0
        %v547 = vrcp.pop %v546
        %v548 = vmul.f32 1.0, %v547
        %v549 = vld [vmem:[%s6] sm:$0x1]
        %v551 = vlaneseq
        %v552 = vshrl.u32 %v551, 7
        %v553 = vsub.s32 0, %v552
        %v554 = vrot.slane %v549, %v553
        %555 = vrot.lane.b32.xlu0 %v554, 64
        %v556 = vpop.permute.xlu0 %555
        %v558 = vadd.f32 %v539, %v556
        %560 = vrot.lane.b32.xlu0 %v558, 64
        %v561 = vpop.permute.xlu0 %560
        %v563 = vmul.f32 %v548, %v561
        %565 = vrot.lane.b32.xlu0 %v563, 64
        %v566 = vpop.permute.xlu0 %565
        %v568 = vadd.f32 %v462, %v566
        %v569 = vtanh.pop %v568
        %v570 = vsub.f32 1.0, %v548
        %572 = vrot.lane.b32.xlu0 %v569, 96
        %v573 = vpop.permute.xlu0 %572
        %v575 = vmul.f32 %v570, %v573
        %v576 = vlaneseq
        %v577 = vshrl.u32 %v576, 7
        %v578 = vsub.s32 0, %v577
        %v579 = vrot.slane %v385, %v578
        %580 = vrot.lane.b32.xlu0 %v579, 32
        %v581 = vpop.permute.xlu0 %580
        %v583 = vmul.f32 %v548, %v581
        %v584 = vadd.f32 %v575, %v583
        %586 = vrot.lane.b32.xlu0 %v584, 96
        %v587 = vpop.permute.xlu0 %586
        %vm589 = vcmask 253952
        %590 = vst.msk [vmem:[#allocation2] sm:$0x1] %vm589, %v587
        %s591 = scalar_lea.vmem [#allocation2], 1
        %v592 = vld [vmem:[%s591] sm:$0x1]
        %s593 = scalar_lea.vmem [#allocation8], 32
        %v594 = vld [vmem:[%s593] sm:$0xff]
        %v595 = vld [vmem:[%s593 + $0x8] sm:$0xff]
        %v596 = vld [vmem:[%s593 + $0x10] sm:$0xff]
        %v597 = vld [vmem:[%s593 + $0x18] sm:$0xff]
        %s598 = scalar_lea.vmem %s5, 1
        %v599 = vld [vmem:[%s598] sm:$0x1]
        %v600 = vsel %vm391, %v587, 0
        %602 = vmatprep.subr.mxu0 0.0
        %603 = vmatpush1.msra.mxu0 %v594
        %604 = vmatprep.subr.mxu0 0.0
        %605 = vmatpush1.msra.mxu0 %v595
        %606 = vmatprep.subr.mxu0 0.0
        %607 = vmatpush1.msra.mxu0 %v596
        %608 = vmatprep.subr.mxu0 0.0
        %609 = vmatpush1.msra.mxu0 %v597
        %610 = vmatprep.subr.mxu0 0.0
        %611 = vmatpush1.msra.mxu0 0.0
        %612 = vmatprep.subr.mxu0 0.0
        %613 = vmatpush1.msra.mxu0 0.0
        %614 = vmatprep.subr.mxu0 0.0
        %615 = vmatpush1.msra.mxu0 0.0
        %616 = vmatprep.subr.mxu0 0.0
        %617 = vmatpush1.msra.mxu0 0.0
        %618 = vmatprep.subr.mxu0 0.0
        %619 = vmatpush1.msra.mxu0 0.0
        %620 = vmatprep.subr.mxu0 0.0
        %621 = vmatpush1.msra.mxu0 0.0
        %622 = vmatprep.subr.mxu0 0.0
        %623 = vmatpush1.msra.mxu0 0.0
        %624 = vmatprep.subr.mxu0 0.0
        %625 = vmatpush1.msra.mxu0 0.0
        %626 = vmatprep.subr.mxu0 0.0
        %627 = vmatpush1.msra.mxu0 0.0
        %628 = vmatprep.subr.mxu0 0.0
        %629 = vmatpush1.msra.mxu0 0.0
        %630 = vmatprep.subr.mxu0 0.0
        %631 = vmatpush1.msra.mxu0 0.0
        %632 = vmatprep.subr.mxu0 0.0
        %633 = vmatpush1.msra.mxu0 0.0
        %634 = vmatprep.subr.mxu0 0.0
        %635 = vmatpush1.msra.mxu0 0.0
        %636 = vmatprep.subr.mxu0 0.0
        %637 = vmatpush1.msra.mxu0 0.0
        %638 = vmatprep.subr.mxu0 0.0
        %639 = vmatpush1.msra.mxu0 0.0
        %640 = vmatprep.subr.mxu0 0.0
        %641 = vmatpush1.msra.mxu0 0.0
        %642 = vmatprep.subr.mxu0 0.0
        %643 = vmatpush1.msra.mxu0 0.0
        %644 = vmatprep.subr.mxu0 0.0
        %645 = vmatpush1.msra.mxu0 0.0
        %646 = vmatprep.subr.mxu0 0.0
        %647 = vmatpush1.msra.mxu0 0.0
        %648 = vmatprep.subr.mxu0 0.0
        %649 = vmatpush1.msra.mxu0 0.0
        %650 = vmatprep.subr.mxu0 0.0
        %651 = vmatpush1.msra.mxu0 0.0
        %652 = vmatprep.subr.mxu0 0.0
        %653 = vmatpush1.msra.mxu0 0.0
        %654 = vmatprep.subr.mxu0 0.0
        %655 = vmatpush1.msra.mxu0 0.0
        %656 = vmatprep.subr.mxu0 0.0
        %657 = vmatpush1.msra.mxu0 0.0
        %658 = vmatprep.subr.mxu0 0.0
        %659 = vmatpush1.msra.mxu0 0.0
        %660 = vmatprep.subr.mxu0 0.0
        %661 = vmatpush1.msra.mxu0 0.0
        %662 = vmatprep.subr.mxu0 0.0
        %663 = vmatpush1.msra.mxu0 0.0
        %664 = vmatprep.subr.mxu0 0.0
        %665 = vmatpush1.msra.mxu0 0.0
        %666 = vmatprep.mubr.f32.mxu0 0.0
        %667 = vmatmul.mubr.f32.gmra.mrb[0].mxu0 %v600
        %v668 = vpop.f32.mrb[0].mxu0
        %v669 = vadd.f32 %v599, %v668
        %v670 = vpop.f32.mrb[0].mxu0
        %671 = vdwg.mxu0
        %s672 = scalar_lea.vmem [#allocation10], 32
        %v673 = vld [vmem:[%s672] sm:$0xff]
        %v674 = vld [vmem:[%s672 + $0x8] sm:$0xff]
        %v675 = vld [vmem:[%s672 + $0x10] sm:$0xff]
        %v676 = vld [vmem:[%s672 + $0x18] sm:$0xff]
        %v678 = vsel %vm391, %v592, 0
        %680 = vmatprep.subr.mxu0 0.0
        %681 = vmatpush1.msra.mxu0 %v673
        %682 = vmatprep.subr.mxu0 0.0
        %683 = vmatpush1.msra.mxu0 %v674
        %684 = vmatprep.subr.mxu0 0.0
        %685 = vmatpush1.msra.mxu0 %v675
        %686 = vmatprep.subr.mxu0 0.0
        %687 = vmatpush1.msra.mxu0 %v676
        %688 = vmatprep.subr.mxu0 0.0
        %689 = vmatpush1.msra.mxu0 0.0
        %690 = vmatprep.subr.mxu0 0.0
        %691 = vmatpush1.msra.mxu0 0.0
        %692 = vmatprep.subr.mxu0 0.0
        %693 = vmatpush1.msra.mxu0 0.0
        %694 = vmatprep.subr.mxu0 0.0
        %695 = vmatpush1.msra.mxu0 0.0
        %696 = vmatprep.subr.mxu0 0.0
        %697 = vmatpush1.msra.mxu0 0.0
        %698 = vmatprep.subr.mxu0 0.0
        %699 = vmatpush1.msra.mxu0 0.0
        %700 = vmatprep.subr.mxu0 0.0
        %701 = vmatpush1.msra.mxu0 0.0
        %702 = vmatprep.subr.mxu0 0.0
        %703 = vmatpush1.msra.mxu0 0.0
        %704 = vmatprep.subr.mxu0 0.0
        %705 = vmatpush1.msra.mxu0 0.0
        %706 = vmatprep.subr.mxu0 0.0
        %707 = vmatpush1.msra.mxu0 0.0
        %708 = vmatprep.subr.mxu0 0.0
        %709 = vmatpush1.msra.mxu0 0.0
        %710 = vmatprep.subr.mxu0 0.0
        %711 = vmatpush1.msra.mxu0 0.0
        %712 = vmatprep.subr.mxu0 0.0
        %713 = vmatpush1.msra.mxu0 0.0
        %714 = vmatprep.subr.mxu0 0.0
        %715 = vmatpush1.msra.mxu0 0.0
        %716 = vmatprep.subr.mxu0 0.0
        %717 = vmatpush1.msra.mxu0 0.0
        %718 = vmatprep.subr.mxu0 0.0
        %719 = vmatpush1.msra.mxu0 0.0
        %720 = vmatprep.subr.mxu0 0.0
        %721 = vmatpush1.msra.mxu0 0.0
        %722 = vmatprep.subr.mxu0 0.0
        %723 = vmatpush1.msra.mxu0 0.0
        %724 = vmatprep.subr.mxu0 0.0
        %725 = vmatpush1.msra.mxu0 0.0
        %726 = vmatprep.subr.mxu0 0.0
        %727 = vmatpush1.msra.mxu0 0.0
        %728 = vmatprep.subr.mxu0 0.0
        %729 = vmatpush1.msra.mxu0 0.0
        %730 = vmatprep.subr.mxu0 0.0
        %731 = vmatpush1.msra.mxu0 0.0
        %732 = vmatprep.subr.mxu0 0.0
        %733 = vmatpush1.msra.mxu0 0.0
        %734 = vmatprep.subr.mxu0 0.0
        %735 = vmatpush1.msra.mxu0 0.0
        %736 = vmatprep.subr.mxu0 0.0
        %737 = vmatpush1.msra.mxu0 0.0
        %738 = vmatprep.subr.mxu0 0.0
        %739 = vmatpush1.msra.mxu0 0.0
        %740 = vmatprep.subr.mxu0 0.0
        %741 = vmatpush1.msra.mxu0 0.0
        %742 = vmatprep.subr.mxu0 0.0
        %743 = vmatpush1.msra.mxu0 0.0
        %744 = vmatprep.mubr.f32.mxu0 0.0
        %745 = vmatmul.mubr.f32.gmra.mrb[0].mxu0 %v678
        %v746 = vpop.f32.mrb[0].mxu0
        %v747 = vadd.f32 0.0, %v746
        %v748 = vpop.f32.mrb[0].mxu0
        %749 = vdwg.mxu0
        %v750 = vadd.f32 %v669, %v747
        %v751 = vxor.u32 %v750, 2147483648
        %v752 = vmul.f32 %v751, 1.442695
        %v753 = vpow.pop %v752
        %v754 = vadd.f32 %v753, 1.0
        %v755 = vrcp.pop %v754
        %v756 = vmul.f32 1.0, %v755
        %s757 = scalar_lea.vmem %s6, 1
        %v758 = vld [vmem:[%s757] sm:$0x1]
        %v760 = vlaneseq
        %v761 = vshrl.u32 %v760, 7
        %v762 = vsub.s32 0, %v761
        %v763 = vrot.slane %v758, %v762
        %764 = vrot.lane.b32.xlu0 %v763, 64
        %v765 = vpop.permute.xlu0 %764
        %v767 = vadd.f32 %v747, %v765
        %769 = vrot.lane.b32.xlu0 %v767, 64
        %v770 = vpop.permute.xlu0 %769
        %v772 = vmul.f32 %v756, %v770
        %774 = vrot.lane.b32.xlu0 %v772, 64
        %v775 = vpop.permute.xlu0 %774
        %v777 = vadd.f32 %v669, %v775
        %v778 = vtanh.pop %v777
        %v779 = vsub.f32 1.0, %v756
        %781 = vrot.lane.b32.xlu0 %v778, 96
        %v782 = vpop.permute.xlu0 %781
        %v784 = vmul.f32 %v779, %v782
        %v785 = vlaneseq
        %v786 = vshrl.u32 %v785, 7
        %v787 = vsub.s32 0, %v786
        %v788 = vrot.slane %v592, %v787
        %789 = vrot.lane.b32.xlu0 %v788, 32
        %v790 = vpop.permute.xlu0 %789
        %v792 = vmul.f32 %v756, %v790
        %v793 = vadd.f32 %v784, %v792
        %795 = vrot.lane.b32.xlu0 %v793, 96
        %v796 = vpop.permute.xlu0 %795
        %798 = vst.msk [vmem:[%s591] sm:$0x1] %vm589, %v796
        %v799 = vld [vmem:[#allocation11] sm:$0xff]
        %v800 = vld [vmem:[#allocation11 + $0x8] sm:$0xff]
        %v801 = vld [vmem:[#allocation11 + $0x10] sm:$0xff]
        %v802 = vld [vmem:[#allocation11 + $0x18] sm:$0xff]
        %v803 = vld [vmem:[%s8] sm:$0x1]
        %v804 = vsel %vm391, %v796, 0
        %806 = vmatprep.subr.mxu0 0.0
        %807 = vmatpush1.msra.mxu0 %v799
        %808 = vmatprep.subr.mxu0 0.0
        %809 = vmatpush1.msra.mxu0 %v800
        %810 = vmatprep.subr.mxu0 0.0
        %811 = vmatpush1.msra.mxu0 %v801
        %812 = vmatprep.subr.mxu0 0.0
        %813 = vmatpush1.msra.mxu0 %v802
        %814 = vmatprep.subr.mxu0 0.0
        %815 = vmatpush1.msra.mxu0 0.0
        %816 = vmatprep.subr.mxu0 0.0
        %817 = vmatpush1.msra.mxu0 0.0
        %818 = vmatprep.subr.mxu0 0.0
        %819 = vmatpush1.msra.mxu0 0.0
        %820 = vmatprep.subr.mxu0 0.0
        %821 = vmatpush1.msra.mxu0 0.0
        %822 = vmatprep.subr.mxu0 0.0
        %823 = vmatpush1.msra.mxu0 0.0
        %824 = vmatprep.subr.mxu0 0.0
        %825 = vmatpush1.msra.mxu0 0.0
        %826 = vmatprep.subr.mxu0 0.0
        %827 = vmatpush1.msra.mxu0 0.0
        %828 = vmatprep.subr.mxu0 0.0
        %829 = vmatpush1.msra.mxu0 0.0
        %830 = vmatprep.subr.mxu0 0.0
        %831 = vmatpush1.msra.mxu0 0.0
        %832 = vmatprep.subr.mxu0 0.0
        %833 = vmatpush1.msra.mxu0 0.0
        %834 = vmatprep.subr.mxu0 0.0
        %835 = vmatpush1.msra.mxu0 0.0
        %836 = vmatprep.subr.mxu0 0.0
        %837 = vmatpush1.msra.mxu0 0.0
        %838 = vmatprep.subr.mxu0 0.0
        %839 = vmatpush1.msra.mxu0 0.0
        %840 = vmatprep.subr.mxu0 0.0
        %841 = vmatpush1.msra.mxu0 0.0
        %842 = vmatprep.subr.mxu0 0.0
        %843 = vmatpush1.msra.mxu0 0.0
        %844 = vmatprep.subr.mxu0 0.0
        %845 = vmatpush1.msra.mxu0 0.0
        %846 = vmatprep.subr.mxu0 0.0
        %847 = vmatpush1.msra.mxu0 0.0
        %848 = vmatprep.subr.mxu0 0.0
        %849 = vmatpush1.msra.mxu0 0.0
        %850 = vmatprep.subr.mxu0 0.0
        %851 = vmatpush1.msra.mxu0 0.0
        %852 = vmatprep.subr.mxu0 0.0
        %853 = vmatpush1.msra.mxu0 0.0
        %854 = vmatprep.subr.mxu0 0.0
        %855 = vmatpush1.msra.mxu0 0.0
        %856 = vmatprep.subr.mxu0 0.0
        %857 = vmatpush1.msra.mxu0 0.0
        %858 = vmatprep.subr.mxu0 0.0
        %859 = vmatpush1.msra.mxu0 0.0
        %860 = vmatprep.subr.mxu0 0.0
        %861 = vmatpush1.msra.mxu0 0.0
        %862 = vmatprep.subr.mxu0 0.0
        %863 = vmatpush1.msra.mxu0 0.0
        %864 = vmatprep.subr.mxu0 0.0
        %865 = vmatpush1.msra.mxu0 0.0
        %866 = vmatprep.subr.mxu0 0.0
        %867 = vmatpush1.msra.mxu0 0.0
        %868 = vmatprep.subr.mxu0 0.0
        %869 = vmatpush1.msra.mxu0 0.0
        %870 = vmatprep.mubr.f32.mxu0 0.0
        %871 = vmatmul.mubr.f32.gmra.mrb[0].mxu0 %v804
        %v872 = vpop.f32.mrb[0].mxu0
        %v873 = vadd.f32 %v803, %v872
        %v874 = vpop.f32.mrb[0].mxu0
        %875 = vdwg.mxu0
        %876 = vst [vmem:[%s370] sm:$0x1] %v873
        %p877 = scmp.eq.s32.totalorder %s33, 7
        // Predicated region
        $region73: #{tpu_custom_call.1} parent=51 // pred_check
          %p878 = pneg %p877
        $region74: #{tpu_custom_call.1} parent=51 // pred_check_branch
          %880 = sbr.rel (%p878) target = $region76
        $region75: #{tpu_custom_call.1} parent=51 // pred_region
          %v881 = vld [vmem:[#allocation2] sm:$0x1]
          %v882 = vld [vmem:[#allocation2 + $0x1] sm:$0x1]
          %883 = vst.msk [vmem:[#allocation14] sm:$0x1] %vm589, %v881
          %884 = vst.msk [vmem:[#allocation14 + $0x1] sm:$0x1] %vm589, %v882
        $region76: #{tpu_custom_call.1} parent=51 // pred_fallthru
          _
        %s885 = sand.u32 %s209, 1
        %s886 = scalar_lea.sflag [#allocation7], %s885
        %s887 = sand.u32 %s209, 1
        %s888 = scalar_lea.vmem [#allocation13], %s887
        // Predicated region
        $region77: #{tpu_custom_call.1} parent=51 // pred_check
          %p889 = pneg %p219
        $region78: #{tpu_custom_call.1} parent=51 // pred_check_branch
          %891 = sbr.rel (%p889) target = $region80
        $region79: #{tpu_custom_call.1} parent=51 // pred_region
          %s893 = ssub.s32 16, 16
          %894 = vsyncadd %s886, %s893
          %s895 = smul.addr %s33, 16
          %s896 = scalar_lea.hbm %s9, %s895
          %s898 = sshll.u32 %s888, 4
          %s899 = int_to_ptr.vmem [resolvable:$true] %s898
          %901 = dma.vmem_to_hbm [thread:$0]  %s899, 16, %s896, %s886
        $region80: #{tpu_custom_call.1} parent=51 // pred_fallthru
          _
        // Predicated region
        $region81: #{tpu_custom_call.1} parent=51 // pred_check
          %p902 = pneg %p240
        $region82: #{tpu_custom_call.1} parent=51 // pred_check_branch
          %904 = sbr.rel (%p902) target = $region84
        $region83: #{tpu_custom_call.1} parent=51 // pred_region
          %s906 = ssub.s32 32, 32
          %907 = vsyncadd [#allocation15], %s906
          %s908 = sshll.u32 [#allocation14], 4
          %s909 = int_to_ptr.vmem [resolvable:$true] %s908
          %914 = dma.vmem_to_hbm [thread:$0]  %s909, 32, %s10, [#allocation15], 16, 16, 1
        $region84: #{tpu_custom_call.1} parent=51 // pred_fallthru
          _
        // Predicated region
        $region85: #{tpu_custom_call.1} parent=51 // pred_check
          %p915 = pneg %p240
        $region86: #{tpu_custom_call.1} parent=51 // pred_check_branch
          %917 = sbr.rel (%p915) target = $region88
        $region87: #{tpu_custom_call.1} parent=51 // pred_region
          %918 = dma.done [#allocation15], 32
        $region88: #{tpu_custom_call.1} parent=51 // pred_fallthru
          _
      $region52: #{tpu_custom_call.1} parent=5 // pred_fallthru
        _
      %p919 = scmp.le.s32.totalorder 2, %s28
      // Predicated region
      $region89: #{tpu_custom_call.1} parent=5 // pred_check
        %p920 = pneg %p919
      $region90: #{tpu_custom_call.1} parent=5 // pred_check_branch
        %922 = sbr.rel (%p920) target = $region92
      $region91: #{tpu_custom_call.1} parent=5 // pred_region
        %s923 = ssub.s32 %s28, 2
        // Predicated region
        $region93: #{tpu_custom_call.1} parent=91 // pred_check
          %p924 = pneg %p225
        $region94: #{tpu_custom_call.1} parent=91 // pred_check_branch
          %926 = sbr.rel (%p924) target = $region96
        $region95: #{tpu_custom_call.1} parent=91 // pred_region
          %s927 = sand.u32 %s210, 1
          %s928 = scalar_lea.sflag [#allocation7], %s927
          %s929 = sand.u32 %s210, 1
          %s930 = scalar_lea.vmem [#allocation13], %s929
          %931 = dma.done %s928, 16
        $region96: #{tpu_custom_call.1} parent=91 // pred_fallthru
          _
      $region92: #{tpu_custom_call.1} parent=5 // pred_fallthru
        _
    $region6: #{tpu_custom_call.1} parent=1 // loop_footer
      %s32 = sadd.s32 1, %s28
    $region7: #{tpu_custom_call.1} parent=1 // loop_footer_branch
      %27 = sbr.rel target = $region3
    $region8: #{tpu_custom_call.1} parent=1 // loop_exit
      _
    %932 = vsyncpa [#allocation6], 1
    %s933 = scalar_lea.sflag [#allocation6], 1
    %934 = vsyncpa %s933, 1
    %935 = vsyncpa [#allocation9], 1
    %936 = vsyncpa [#allocation12], 1
    %937 = vsyncpa [#allocation7], 1
    %s938 = scalar_lea.sflag [#allocation7], 1
    %939 = vsyncpa %s938, 1
    %940 = vsyncpa [#allocation15], 1

</llo_original>
